<compile_context>
chip_gen: v6e
topology: v6e:2x2x1
jax: 0.10.0
libtpu: 0.0.40
codegen_flags: <defaults>
</compile_context>

<pallas_src>
import jax
import jax.numpy as jnp
from jax.experimental import pallas as pl
from jax.experimental.pallas import tpu as pltpu


def _round_up(x, m):
    return (x + m - 1) // m * m


def fcnet_kernel(x_ref, w0_ref, b0_ref, *rest):
    """rest = 16 ResLayer refs (w1,b1,w2,b2)*4, class_w ref, out ref, h scratch."""
    res_refs = rest[:16]
    cw_ref = rest[16]
    o_ref = rest[17]
    h_ref = rest[18]

    # Trunk: compute once per batch tile (only when this is the first class tile)
    # and cache the [TILE_B, F] features in VMEM scratch.
    @pl.when(pl.program_id(1) == 0)
    def _trunk():
        x = x_ref[...].astype(jnp.bfloat16)
        h = jnp.dot(x, w0_ref[...], preferred_element_type=jnp.float32)
        h = jnp.maximum(h + b0_ref[...], 0.0)
        for i in range(4):
            w1, b1, w2, b2 = res_refs[4 * i:4 * i + 4]
            y = jnp.dot(h.astype(jnp.bfloat16), w1[...],
                        preferred_element_type=jnp.float32) + b1[...]
            y = jnp.maximum(y, 0.0)
            # nn.Dropout() -> identity in eval mode
            y = jnp.dot(y.astype(jnp.bfloat16), w2[...],
                        preferred_element_type=jnp.float32) + b2[...]
            y = jnp.maximum(y, 0.0)
            h = h + y
        h_ref[...] = h

    # class_emb (no bias) for this class tile + sigmoid epilogue.
    logits = jnp.dot(h_ref[...].astype(jnp.bfloat16), cw_ref[...],
                     preferred_element_type=jnp.float32)
    # sigmoid = 1 / (1 + exp(-x)): exp -> EUP, approx reciprocal -> EUP (frees VALU).
    o_ref[...] = pl.reciprocal(1.0 + jnp.exp(-logits), approx=True)


def fcnet_forward(x, params, *, tile_b=256, tile_n=1024):
    """params: dict with w0, b0, res (list of 4 tuples (w1,b1,w2,b2)), class_w."""
    B, num_inputs = x.shape
    F = params["w0"].shape[1]
    C = params["class_w"].shape[1]

    # Tile sizes: sublane-aligned batch tile, lane-dense (multiple of 128) class tile.
    TILE_B = min(tile_b, _round_up(B, 8))
    TILE_N = min(tile_n, _round_up(C, 128))
    B_pad = _round_up(B, TILE_B)
    C_pad = _round_up(C, TILE_N)

    # Padded inputs (zero padding: padded rows are sliced off, padded class
    # columns have zero weights and are sliced off).
    x_p = jnp.zeros((B_pad, num_inputs), jnp.float32).at[:B].set(
        x.astype(jnp.float32))
    cw_p = jnp.zeros((F, C_pad), jnp.bfloat16).at[:, :C].set(
        params["class_w"].astype(jnp.bfloat16))

    bf16 = lambda w: w.astype(jnp.bfloat16)
    f32 = lambda b: b.astype(jnp.float32)

    flat_inputs = [x_p, bf16(params["w0"]), f32(params["b0"])]
    for (w1, b1, w2, b2) in params["res"]:
        flat_inputs += [bf16(w1), f32(b1), bf16(w2), f32(b2)]
    flat_inputs.append(cw_p)

    def resident(shape):  # trunk params: same block for every grid step
        return pl.BlockSpec(shape, lambda i, j: (0, 0))

    in_specs = [pl.BlockSpec((TILE_B, num_inputs), lambda i, j: (i, 0))]
    in_specs += [resident(a.shape) for a in flat_inputs[1:-1]]
    in_specs.append(pl.BlockSpec((F, TILE_N), lambda i, j: (0, j)))
    out_specs = pl.BlockSpec((TILE_B, TILE_N), lambda i, j: (i, j))

    # VMEM budget (explicit, sized for v7x's 64 MiB physical VMEM).
    param_bytes = sum(a.size * a.dtype.itemsize for a in flat_inputs[1:-1])
    tile_bytes = 2 * (TILE_B * num_inputs * 4      # x tile (double-buffered)
                      + F * TILE_N * 2             # class_w tile (bf16)
                      + TILE_B * TILE_N * 4)       # output tile (f32)
    scratch_bytes = TILE_B * F * 4
    vmem_bytes = int(1.5 * (param_bytes + tile_bytes + scratch_bytes)) + (2 << 20)
    vmem_bytes = max(min(vmem_bytes, 48 << 20), 8 << 20)

    # Advisory cost estimate for the XLA scheduler.
    trunk_flops = 2 * B_pad * (num_inputs * F + 8 * F * F)
    class_flops = 2 * B_pad * F * C_pad
    cost = pl.CostEstimate(
        flops=trunk_flops + class_flops,
        transcendentals=B_pad * C_pad,
        bytes_accessed=(x_p.size * 4 + param_bytes + cw_p.size * 2
                        + B_pad * C_pad * 4),
    )

    grid_spec = pltpu.PrefetchScalarGridSpec(
        num_scalar_prefetch=0,
        grid=(B_pad // TILE_B, C_pad // TILE_N),
        in_specs=in_specs,
        out_specs=out_specs,
        scratch_shapes=[pltpu.VMEM((TILE_B, F), jnp.float32)],
    )

    out = pl.pallas_call(
        fcnet_kernel,
        out_shape=jax.ShapeDtypeStruct((B_pad, C_pad), jnp.float32),
        grid_spec=grid_spec,
        compiler_params=pltpu.CompilerParams(
            dimension_semantics=("parallel", "arbitrary"),
            vmem_limit_bytes=vmem_bytes,
        ),
        cost_estimate=cost,
    )(*flat_inputs)

    return out[:B, :C]


def _linear_params(key, fan_in, fan_out):
    """PyTorch nn.Linear default init: U(-1/sqrt(fan_in), 1/sqrt(fan_in))."""
    kw, kb = jax.random.split(key)
    bound = 1.0 / (fan_in ** 0.5)
    w = jax.random.uniform(kw, (fan_in, fan_out), jnp.float32, -bound, bound)
    b = jax.random.uniform(kb, (1, fan_out), jnp.float32, -bound, bound)
    return w, b


def make_fcnet_params(key, num_inputs, num_classes, num_filts):
    keys = jax.random.split(key, 6)
    w0, b0 = _linear_params(keys[0], num_inputs, num_filts)
    res = []
    for i in range(4):
        k1, k2 = jax.random.split(keys[1 + i])
        w1, b1 = _linear_params(k1, num_filts, num_filts)
        w2, b2 = _linear_params(k2, num_filts, num_filts)
        res.append((w1, b1, w2, b2))
    # class_emb: Linear(num_filts, num_classes, bias=False)
    bound = 1.0 / (num_filts ** 0.5)
    class_w = jax.random.uniform(
        keys[5], (num_filts, num_classes), jnp.float32, -bound, bound
    )
    return {"w0": w0, "b0": b0, "res": res, "class_w": class_w}


def fcnet_reference(x, params):
    """Plain-JAX reference matching the kernel's bf16-matmul / f32-epilogue dtypes."""
    def bdot(a, b):
        return jnp.dot(a.astype(jnp.bfloat16), b.astype(jnp.bfloat16),
                       preferred_element_type=jnp.float32)

    h = jnp.maximum(bdot(x, params["w0"]) + params["b0"], 0.0)
    for (w1, b1, w2, b2) in params["res"]:
        y = jnp.maximum(bdot(h, w1) + b1, 0.0)
        y = jnp.maximum(bdot(y, w2) + b2, 0.0)
        h = h + y
    return jax.nn.sigmoid(bdot(h, params["class_w"]))


if __name__ == "__main__":
    B, num_inputs, num_classes, num_filts = 8, 4, 16, 32

    key = jax.random.PRNGKey(0)
    kx, kp = jax.random.split(key)
    x = jax.random.normal(kx, (B, num_inputs), jnp.float32)
    params = make_fcnet_params(kp, num_inputs, num_classes, num_filts)

    out = jax.block_until_ready(fcnet_forward(x, params))
    ref = jax.block_until_ready(fcnet_reference(x, params))

    assert out.shape == (B, num_classes)
    assert bool(jnp.all(jnp.isfinite(out)))
    max_err = float(jnp.max(jnp.abs(out - ref)))
    # Outputs are sigmoid probabilities; tolerance covers the approximate EUP
    # reciprocal in the kernel's sigmoid epilogue.
    assert max_err < 1e-2, f"mismatch vs reference: max |err| = {max_err}"

    print("KERNEL_OK")
</pallas_src>

<mosaic_0001>
module attributes {stable_mosaic.version = 11 : i64} {
  func.func @fcnet_kernel(%arg0: i32, %arg1: i32, %arg2: memref<8x4xf32, #tpu.memory_space<vmem>>, %arg3: memref<4x32xbf16, #tpu.memory_space<vmem>>, %arg4: memref<1x32xf32, #tpu.memory_space<vmem>>, %arg5: memref<32x32xbf16, #tpu.memory_space<vmem>>, %arg6: memref<1x32xf32, #tpu.memory_space<vmem>>, %arg7: memref<32x32xbf16, #tpu.memory_space<vmem>>, %arg8: memref<1x32xf32, #tpu.memory_space<vmem>>, %arg9: memref<32x32xbf16, #tpu.memory_space<vmem>>, %arg10: memref<1x32xf32, #tpu.memory_space<vmem>>, %arg11: memref<32x32xbf16, #tpu.memory_space<vmem>>, %arg12: memref<1x32xf32, #tpu.memory_space<vmem>>, %arg13: memref<32x32xbf16, #tpu.memory_space<vmem>>, %arg14: memref<1x32xf32, #tpu.memory_space<vmem>>, %arg15: memref<32x32xbf16, #tpu.memory_space<vmem>>, %arg16: memref<1x32xf32, #tpu.memory_space<vmem>>, %arg17: memref<32x32xbf16, #tpu.memory_space<vmem>>, %arg18: memref<1x32xf32, #tpu.memory_space<vmem>>, %arg19: memref<32x32xbf16, #tpu.memory_space<vmem>>, %arg20: memref<1x32xf32, #tpu.memory_space<vmem>>, %arg21: memref<32x128xbf16, #tpu.memory_space<vmem>>, %arg22: memref<8x128xf32, #tpu.memory_space<vmem>>, %arg23: memref<8x32xf32, #tpu.memory_space<vmem>>) attributes {dimension_semantics = [#tpu.dimension_semantics<parallel>, #tpu.dimension_semantics<arbitrary>], iteration_bounds = array<i64: 1, 1>, scalar_prefetch = 0 : i64, scratch_operands = 1 : i64, tpu.core_type = #tpu.core_type<tc>, window_params = [{transform_indices = @transform_0, window_bounds = array<i64: 8, 4>}, {pipeline_mode = #tpu.pipeline_mode<synchronous>, transform_indices = @transform_1, window_bounds = array<i64: 4, 32>}, {pipeline_mode = #tpu.pipeline_mode<synchronous>, transform_indices = @transform_2, window_bounds = array<i64: 1, 32>}, {pipeline_mode = #tpu.pipeline_mode<synchronous>, transform_indices = @transform_3, window_bounds = array<i64: 32, 32>}, {pipeline_mode = #tpu.pipeline_mode<synchronous>, transform_indices = @transform_4, window_bounds = array<i64: 1, 32>}, {pipeline_mode = #tpu.pipeline_mode<synchronous>, transform_indices = @transform_5, window_bounds = array<i64: 32, 32>}, {pipeline_mode = #tpu.pipeline_mode<synchronous>, transform_indices = @transform_6, window_bounds = array<i64: 1, 32>}, {pipeline_mode = #tpu.pipeline_mode<synchronous>, transform_indices = @transform_7, window_bounds = array<i64: 32, 32>}, {pipeline_mode = #tpu.pipeline_mode<synchronous>, transform_indices = @transform_8, window_bounds = array<i64: 1, 32>}, {pipeline_mode = #tpu.pipeline_mode<synchronous>, transform_indices = @transform_9, window_bounds = array<i64: 32, 32>}, {pipeline_mode = #tpu.pipeline_mode<synchronous>, transform_indices = @transform_10, window_bounds = array<i64: 1, 32>}, {pipeline_mode = #tpu.pipeline_mode<synchronous>, transform_indices = @transform_11, window_bounds = array<i64: 32, 32>}, {pipeline_mode = #tpu.pipeline_mode<synchronous>, transform_indices = @transform_12, window_bounds = array<i64: 1, 32>}, {pipeline_mode = #tpu.pipeline_mode<synchronous>, transform_indices = @transform_13, window_bounds = array<i64: 32, 32>}, {pipeline_mode = #tpu.pipeline_mode<synchronous>, transform_indices = @transform_14, window_bounds = array<i64: 1, 32>}, {pipeline_mode = #tpu.pipeline_mode<synchronous>, transform_indices = @transform_15, window_bounds = array<i64: 32, 32>}, {pipeline_mode = #tpu.pipeline_mode<synchronous>, transform_indices = @transform_16, window_bounds = array<i64: 1, 32>}, {pipeline_mode = #tpu.pipeline_mode<synchronous>, transform_indices = @transform_17, window_bounds = array<i64: 32, 32>}, {pipeline_mode = #tpu.pipeline_mode<synchronous>, transform_indices = @transform_18, window_bounds = array<i64: 1, 32>}, {transform_indices = @transform_19, window_bounds = array<i64: 32, 128>}, {transform_indices = @transform_20, window_bounds = array<i64: 8, 128>}]} {
    %c0_i32 = arith.constant 0 : i32
    %0 = arith.cmpi eq, %arg1, %c0_i32 : i32
    %1 = arith.extui %0 : i1 to i32
    %c0_i32_0 = arith.constant 0 : i32
    %2 = arith.cmpi ne, %1, %c0_i32_0 : i32
    scf.if %2 {
      %c0_8 = arith.constant 0 : index
      %c0_9 = arith.constant 0 : index
      %14 = vector.load %arg2[%c0_8, %c0_9] : memref<8x4xf32, #tpu.memory_space<vmem>>, vector<8x4xf32>
      %15 = arith.truncf %14 : vector<8x4xf32> to vector<8x4xbf16>
      %c0_10 = arith.constant 0 : index
      %c0_11 = arith.constant 0 : index
      %16 = vector.load %arg3[%c0_10, %c0_11] : memref<4x32xbf16, #tpu.memory_space<vmem>>, vector<4x32xbf16>
      %cst_12 = arith.constant dense<0.000000e+00> : vector<8x32xf32>
      %17 = tpu.matmul %15, %16, %cst_12 {dimension_numbers = #tpu.dot_dimension_numbers<[1], [0], [0], [1], [0, 0, 1, 1], [], []>} : vector<8x4xbf16>, vector<4x32xbf16>, vector<8x32xf32> -> vector<8x32xf32>
      %c0_13 = arith.constant 0 : index
      %c0_14 = arith.constant 0 : index
      %18 = vector.load %arg4[%c0_13, %c0_14] : memref<1x32xf32, #tpu.memory_space<vmem>>, vector<1x32xf32>
      %19 = vector.broadcast %18 : vector<1x32xf32> to vector<8x32xf32>
      %20 = arith.addf %17, %19 : vector<8x32xf32>
      %cst_15 = arith.constant 0.000000e+00 : f32
      %21 = vector.broadcast %cst_15 : f32 to vector<8x32xf32>
      %22 = arith.maximumf %20, %21 : vector<8x32xf32>
      %23 = arith.truncf %22 : vector<8x32xf32> to vector<8x32xbf16>
      %c0_16 = arith.constant 0 : index
      %c0_17 = arith.constant 0 : index
      %24 = vector.load %arg5[%c0_16, %c0_17] : memref<32x32xbf16, #tpu.memory_space<vmem>>, vector<32x32xbf16>
      %cst_18 = arith.constant dense<0.000000e+00> : vector<8x32xf32>
      %25 = tpu.matmul %23, %24, %cst_18 {dimension_numbers = #tpu.dot_dimension_numbers<[1], [0], [0], [1], [0, 0, 1, 1], [], []>} : vector<8x32xbf16>, vector<32x32xbf16>, vector<8x32xf32> -> vector<8x32xf32>
      %c0_19 = arith.constant 0 : index
      %c0_20 = arith.constant 0 : index
      %26 = vector.load %arg6[%c0_19, %c0_20] : memref<1x32xf32, #tpu.memory_space<vmem>>, vector<1x32xf32>
      %27 = vector.broadcast %26 : vector<1x32xf32> to vector<8x32xf32>
      %28 = arith.addf %25, %27 : vector<8x32xf32>
      %cst_21 = arith.constant 0.000000e+00 : f32
      %29 = vector.broadcast %cst_21 : f32 to vector<8x32xf32>
      %30 = arith.maximumf %28, %29 : vector<8x32xf32>
      %31 = arith.truncf %30 : vector<8x32xf32> to vector<8x32xbf16>
      %c0_22 = arith.constant 0 : index
      %c0_23 = arith.constant 0 : index
      %32 = vector.load %arg7[%c0_22, %c0_23] : memref<32x32xbf16, #tpu.memory_space<vmem>>, vector<32x32xbf16>
      %cst_24 = arith.constant dense<0.000000e+00> : vector<8x32xf32>
      %33 = tpu.matmul %31, %32, %cst_24 {dimension_numbers = #tpu.dot_dimension_numbers<[1], [0], [0], [1], [0, 0, 1, 1], [], []>} : vector<8x32xbf16>, vector<32x32xbf16>, vector<8x32xf32> -> vector<8x32xf32>
      %c0_25 = arith.constant 0 : index
      %c0_26 = arith.constant 0 : index
      %34 = vector.load %arg8[%c0_25, %c0_26] : memref<1x32xf32, #tpu.memory_space<vmem>>, vector<1x32xf32>
      %35 = vector.broadcast %34 : vector<1x32xf32> to vector<8x32xf32>
      %36 = arith.addf %33, %35 : vector<8x32xf32>
      %cst_27 = arith.constant 0.000000e+00 : f32
      %37 = vector.broadcast %cst_27 : f32 to vector<8x32xf32>
      %38 = arith.maximumf %36, %37 : vector<8x32xf32>
      %39 = arith.addf %22, %38 : vector<8x32xf32>
      %40 = arith.truncf %39 : vector<8x32xf32> to vector<8x32xbf16>
      %c0_28 = arith.constant 0 : index
      %c0_29 = arith.constant 0 : index
      %41 = vector.load %arg9[%c0_28, %c0_29] : memref<32x32xbf16, #tpu.memory_space<vmem>>, vector<32x32xbf16>
      %cst_30 = arith.constant dense<0.000000e+00> : vector<8x32xf32>
      %42 = tpu.matmul %40, %41, %cst_30 {dimension_numbers = #tpu.dot_dimension_numbers<[1], [0], [0], [1], [0, 0, 1, 1], [], []>} : vector<8x32xbf16>, vector<32x32xbf16>, vector<8x32xf32> -> vector<8x32xf32>
      %c0_31 = arith.constant 0 : index
      %c0_32 = arith.constant 0 : index
      %43 = vector.load %arg10[%c0_31, %c0_32] : memref<1x32xf32, #tpu.memory_space<vmem>>, vector<1x32xf32>
      %44 = vector.broadcast %43 : vector<1x32xf32> to vector<8x32xf32>
      %45 = arith.addf %42, %44 : vector<8x32xf32>
      %cst_33 = arith.constant 0.000000e+00 : f32
      %46 = vector.broadcast %cst_33 : f32 to vector<8x32xf32>
      %47 = arith.maximumf %45, %46 : vector<8x32xf32>
      %48 = arith.truncf %47 : vector<8x32xf32> to vector<8x32xbf16>
      %c0_34 = arith.constant 0 : index
      %c0_35 = arith.constant 0 : index
      %49 = vector.load %arg11[%c0_34, %c0_35] : memref<32x32xbf16, #tpu.memory_space<vmem>>, vector<32x32xbf16>
      %cst_36 = arith.constant dense<0.000000e+00> : vector<8x32xf32>
      %50 = tpu.matmul %48, %49, %cst_36 {dimension_numbers = #tpu.dot_dimension_numbers<[1], [0], [0], [1], [0, 0, 1, 1], [], []>} : vector<8x32xbf16>, vector<32x32xbf16>, vector<8x32xf32> -> vector<8x32xf32>
      %c0_37 = arith.constant 0 : index
      %c0_38 = arith.constant 0 : index
      %51 = vector.load %arg12[%c0_37, %c0_38] : memref<1x32xf32, #tpu.memory_space<vmem>>, vector<1x32xf32>
      %52 = vector.broadcast %51 : vector<1x32xf32> to vector<8x32xf32>
      %53 = arith.addf %50, %52 : vector<8x32xf32>
      %cst_39 = arith.constant 0.000000e+00 : f32
      %54 = vector.broadcast %cst_39 : f32 to vector<8x32xf32>
      %55 = arith.maximumf %53, %54 : vector<8x32xf32>
      %56 = arith.addf %39, %55 : vector<8x32xf32>
      %57 = arith.truncf %56 : vector<8x32xf32> to vector<8x32xbf16>
      %c0_40 = arith.constant 0 : index
      %c0_41 = arith.constant 0 : index
      %58 = vector.load %arg13[%c0_40, %c0_41] : memref<32x32xbf16, #tpu.memory_space<vmem>>, vector<32x32xbf16>
      %cst_42 = arith.constant dense<0.000000e+00> : vector<8x32xf32>
      %59 = tpu.matmul %57, %58, %cst_42 {dimension_numbers = #tpu.dot_dimension_numbers<[1], [0], [0], [1], [0, 0, 1, 1], [], []>} : vector<8x32xbf16>, vector<32x32xbf16>, vector<8x32xf32> -> vector<8x32xf32>
      %c0_43 = arith.constant 0 : index
      %c0_44 = arith.constant 0 : index
      %60 = vector.load %arg14[%c0_43, %c0_44] : memref<1x32xf32, #tpu.memory_space<vmem>>, vector<1x32xf32>
      %61 = vector.broadcast %60 : vector<1x32xf32> to vector<8x32xf32>
      %62 = arith.addf %59, %61 : vector<8x32xf32>
      %cst_45 = arith.constant 0.000000e+00 : f32
      %63 = vector.broadcast %cst_45 : f32 to vector<8x32xf32>
      %64 = arith.maximumf %62, %63 : vector<8x32xf32>
      %65 = arith.truncf %64 : vector<8x32xf32> to vector<8x32xbf16>
      %c0_46 = arith.constant 0 : index
      %c0_47 = arith.constant 0 : index
      %66 = vector.load %arg15[%c0_46, %c0_47] : memref<32x32xbf16, #tpu.memory_space<vmem>>, vector<32x32xbf16>
      %cst_48 = arith.constant dense<0.000000e+00> : vector<8x32xf32>
      %67 = tpu.matmul %65, %66, %cst_48 {dimension_numbers = #tpu.dot_dimension_numbers<[1], [0], [0], [1], [0, 0, 1, 1], [], []>} : vector<8x32xbf16>, vector<32x32xbf16>, vector<8x32xf32> -> vector<8x32xf32>
      %c0_49 = arith.constant 0 : index
      %c0_50 = arith.constant 0 : index
      %68 = vector.load %arg16[%c0_49, %c0_50] : memref<1x32xf32, #tpu.memory_space<vmem>>, vector<1x32xf32>
      %69 = vector.broadcast %68 : vector<1x32xf32> to vector<8x32xf32>
      %70 = arith.addf %67, %69 : vector<8x32xf32>
      %cst_51 = arith.constant 0.000000e+00 : f32
      %71 = vector.broadcast %cst_51 : f32 to vector<8x32xf32>
      %72 = arith.maximumf %70, %71 : vector<8x32xf32>
      %73 = arith.addf %56, %72 : vector<8x32xf32>
      %74 = arith.truncf %73 : vector<8x32xf32> to vector<8x32xbf16>
      %c0_52 = arith.constant 0 : index
      %c0_53 = arith.constant 0 : index
      %75 = vector.load %arg17[%c0_52, %c0_53] : memref<32x32xbf16, #tpu.memory_space<vmem>>, vector<32x32xbf16>
      %cst_54 = arith.constant dense<0.000000e+00> : vector<8x32xf32>
      %76 = tpu.matmul %74, %75, %cst_54 {dimension_numbers = #tpu.dot_dimension_numbers<[1], [0], [0], [1], [0, 0, 1, 1], [], []>} : vector<8x32xbf16>, vector<32x32xbf16>, vector<8x32xf32> -> vector<8x32xf32>
      %c0_55 = arith.constant 0 : index
      %c0_56 = arith.constant 0 : index
      %77 = vector.load %arg18[%c0_55, %c0_56] : memref<1x32xf32, #tpu.memory_space<vmem>>, vector<1x32xf32>
      %78 = vector.broadcast %77 : vector<1x32xf32> to vector<8x32xf32>
      %79 = arith.addf %76, %78 : vector<8x32xf32>
      %cst_57 = arith.constant 0.000000e+00 : f32
      %80 = vector.broadcast %cst_57 : f32 to vector<8x32xf32>
      %81 = arith.maximumf %79, %80 : vector<8x32xf32>
      %82 = arith.truncf %81 : vector<8x32xf32> to vector<8x32xbf16>
      %c0_58 = arith.constant 0 : index
      %c0_59 = arith.constant 0 : index
      %83 = vector.load %arg19[%c0_58, %c0_59] : memref<32x32xbf16, #tpu.memory_space<vmem>>, vector<32x32xbf16>
      %cst_60 = arith.constant dense<0.000000e+00> : vector<8x32xf32>
      %84 = tpu.matmul %82, %83, %cst_60 {dimension_numbers = #tpu.dot_dimension_numbers<[1], [0], [0], [1], [0, 0, 1, 1], [], []>} : vector<8x32xbf16>, vector<32x32xbf16>, vector<8x32xf32> -> vector<8x32xf32>
      %c0_61 = arith.constant 0 : index
      %c0_62 = arith.constant 0 : index
      %85 = vector.load %arg20[%c0_61, %c0_62] : memref<1x32xf32, #tpu.memory_space<vmem>>, vector<1x32xf32>
      %86 = vector.broadcast %85 : vector<1x32xf32> to vector<8x32xf32>
      %87 = arith.addf %84, %86 : vector<8x32xf32>
      %cst_63 = arith.constant 0.000000e+00 : f32
      %88 = vector.broadcast %cst_63 : f32 to vector<8x32xf32>
      %89 = arith.maximumf %87, %88 : vector<8x32xf32>
      %90 = arith.addf %73, %89 : vector<8x32xf32>
      %c0_64 = arith.constant 0 : index
      %c0_65 = arith.constant 0 : index
      %91 = vector.load %arg23[%c0_64, %c0_65] : memref<8x32xf32, #tpu.memory_space<vmem>>, vector<8x32xf32>
      tpu.vector_store %arg23[%c0_64, %c0_65], %90 {strides = array<i32>} : memref<8x32xf32, #tpu.memory_space<vmem>>, vector<8x32xf32>,
    } else {
    }
    %c0 = arith.constant 0 : index
    %c0_1 = arith.constant 0 : index
    %3 = vector.load %arg23[%c0, %c0_1] : memref<8x32xf32, #tpu.memory_space<vmem>>, vector<8x32xf32>
    %4 = arith.truncf %3 : vector<8x32xf32> to vector<8x32xbf16>
    %c0_2 = arith.constant 0 : index
    %c0_3 = arith.constant 0 : index
    %5 = vector.load %arg21[%c0_2, %c0_3] : memref<32x128xbf16, #tpu.memory_space<vmem>>, vector<32x128xbf16>
    %cst = arith.constant dense<0.000000e+00> : vector<8x128xf32>
    %6 = tpu.matmul %4, %5, %cst {dimension_numbers = #tpu.dot_dimension_numbers<[1], [0], [0], [1], [0, 0, 1, 1], [], []>} : vector<8x32xbf16>, vector<32x128xbf16>, vector<8x128xf32> -> vector<8x128xf32>
    %cst_4 = arith.constant 0.000000e+00 : f32
    %7 = vector.broadcast %cst_4 : f32 to vector<8x128xf32>
    %8 = arith.subf %7, %6 : vector<8x128xf32>
    %9 = math.exp %8 : vector<8x128xf32>
    %cst_5 = arith.constant 1.000000e+00 : f32
    %10 = vector.broadcast %cst_5 : f32 to vector<8x128xf32>
    %11 = arith.addf %10, %9 : vector<8x128xf32>
    %12 = tpu.reciprocal %11 {approx = true} : vector<8x128xf32> -> vector<8x128xf32>
    %c0_6 = arith.constant 0 : index
    %c0_7 = arith.constant 0 : index
    %13 = vector.load %arg22[%c0_6, %c0_7] : memref<8x128xf32, #tpu.memory_space<vmem>>, vector<8x128xf32>
    tpu.vector_store %arg22[%c0_6, %c0_7], %12 {strides = array<i32>} : memref<8x128xf32, #tpu.memory_space<vmem>>, vector<8x128xf32>,
    return
  }
  func.func @transform_0(%arg0: i32, %arg1: i32) -> (i32, i32) {
    %c0_i32 = arith.constant 0 : i32
    %c0_i32_0 = arith.constant 0 : i32
    return %arg0, %c0_i32 : i32, i32
  }
  func.func @transform_1(%arg0: i32, %arg1: i32) -> (i32, i32) {
    %c0_i32 = arith.constant 0 : i32
    %c0_i32_0 = arith.constant 0 : i32
    %c0_i32_1 = arith.constant 0 : i32
    return %c0_i32, %c0_i32_0 : i32, i32
  }
  func.func @transform_2(%arg0: i32, %arg1: i32) -> (i32, i32) {
    %c0_i32 = arith.constant 0 : i32
    %c0_i32_0 = arith.constant 0 : i32
    %c0_i32_1 = arith.constant 0 : i32
    return %c0_i32, %c0_i32_0 : i32, i32
  }
  func.func @transform_3(%arg0: i32, %arg1: i32) -> (i32, i32) {
    %c0_i32 = arith.constant 0 : i32
    %c0_i32_0 = arith.constant 0 : i32
    %c0_i32_1 = arith.constant 0 : i32
    return %c0_i32, %c0_i32_0 : i32, i32
  }
  func.func @transform_4(%arg0: i32, %arg1: i32) -> (i32, i32) {
    %c0_i32 = arith.constant 0 : i32
    %c0_i32_0 = arith.constant 0 : i32
    %c0_i32_1 = arith.constant 0 : i32
    return %c0_i32, %c0_i32_0 : i32, i32
  }
  func.func @transform_5(%arg0: i32, %arg1: i32) -> (i32, i32) {
    %c0_i32 = arith.constant 0 : i32
    %c0_i32_0 = arith.constant 0 : i32
    %c0_i32_1 = arith.constant 0 : i32
    return %c0_i32, %c0_i32_0 : i32, i32
  }
  func.func @transform_6(%arg0: i32, %arg1: i32) -> (i32, i32) {
    %c0_i32 = arith.constant 0 : i32
    %c0_i32_0 = arith.constant 0 : i32
    %c0_i32_1 = arith.constant 0 : i32
    return %c0_i32, %c0_i32_0 : i32, i32
  }
  func.func @transform_7(%arg0: i32, %arg1: i32) -> (i32, i32) {
    %c0_i32 = arith.constant 0 : i32
    %c0_i32_0 = arith.constant 0 : i32
    %c0_i32_1 = arith.constant 0 : i32
    return %c0_i32, %c0_i32_0 : i32, i32
  }
  func.func @transform_8(%arg0: i32, %arg1: i32) -> (i32, i32) {
    %c0_i32 = arith.constant 0 : i32
    %c0_i32_0 = arith.constant 0 : i32
    %c0_i32_1 = arith.constant 0 : i32
    return %c0_i32, %c0_i32_0 : i32, i32
  }
  func.func @transform_9(%arg0: i32, %arg1: i32) -> (i32, i32) {
    %c0_i32 = arith.constant 0 : i32
    %c0_i32_0 = arith.constant 0 : i32
    %c0_i32_1 = arith.constant 0 : i32
    return %c0_i32, %c0_i32_0 : i32, i32
  }
  func.func @transform_10(%arg0: i32, %arg1: i32) -> (i32, i32) {
    %c0_i32 = arith.constant 0 : i32
    %c0_i32_0 = arith.constant 0 : i32
    %c0_i32_1 = arith.constant 0 : i32
    return %c0_i32, %c0_i32_0 : i32, i32
  }
  func.func @transform_11(%arg0: i32, %arg1: i32) -> (i32, i32) {
    %c0_i32 = arith.constant 0 : i32
    %c0_i32_0 = arith.constant 0 : i32
    %c0_i32_1 = arith.constant 0 : i32
    return %c0_i32, %c0_i32_0 : i32, i32
  }
  func.func @transform_12(%arg0: i32, %arg1: i32) -> (i32, i32) {
    %c0_i32 = arith.constant 0 : i32
    %c0_i32_0 = arith.constant 0 : i32
    %c0_i32_1 = arith.constant 0 : i32
    return %c0_i32, %c0_i32_0 : i32, i32
  }
  func.func @transform_13(%arg0: i32, %arg1: i32) -> (i32, i32) {
    %c0_i32 = arith.constant 0 : i32
    %c0_i32_0 = arith.constant 0 : i32
    %c0_i32_1 = arith.constant 0 : i32
    return %c0_i32, %c0_i32_0 : i32, i32
  }
  func.func @transform_14(%arg0: i32, %arg1: i32) -> (i32, i32) {
    %c0_i32 = arith.constant 0 : i32
    %c0_i32_0 = arith.constant 0 : i32
    %c0_i32_1 = arith.constant 0 : i32
    return %c0_i32, %c0_i32_0 : i32, i32
  }
  func.func @transform_15(%arg0: i32, %arg1: i32) -> (i32, i32) {
    %c0_i32 = arith.constant 0 : i32
    %c0_i32_0 = arith.constant 0 : i32
    %c0_i32_1 = arith.constant 0 : i32
    return %c0_i32, %c0_i32_0 : i32, i32
  }
  func.func @transform_16(%arg0: i32, %arg1: i32) -> (i32, i32) {
    %c0_i32 = arith.constant 0 : i32
    %c0_i32_0 = arith.constant 0 : i32
    %c0_i32_1 = arith.constant 0 : i32
    return %c0_i32, %c0_i32_0 : i32, i32
  }
  func.func @transform_17(%arg0: i32, %arg1: i32) -> (i32, i32) {
    %c0_i32 = arith.constant 0 : i32
    %c0_i32_0 = arith.constant 0 : i32
    %c0_i32_1 = arith.constant 0 : i32
    return %c0_i32, %c0_i32_0 : i32, i32
  }
  func.func @transform_18(%arg0: i32, %arg1: i32) -> (i32, i32) {
    %c0_i32 = arith.constant 0 : i32
    %c0_i32_0 = arith.constant 0 : i32
    %c0_i32_1 = arith.constant 0 : i32
    return %c0_i32, %c0_i32_0 : i32, i32
  }
  func.func @transform_19(%arg0: i32, %arg1: i32) -> (i32, i32) {
    %c0_i32 = arith.constant 0 : i32
    %c0_i32_0 = arith.constant 0 : i32
    return %c0_i32, %arg1 : i32, i32
  }
  func.func @transform_20(%arg0: i32, %arg1: i32) -> (i32, i32) {
    %c0_i32 = arith.constant 0 : i32
    return %arg0, %arg1 : i32, i32
  }
}

</mosaic_0001>

<llo_original>
// kernel: tpu_custom_call.1
$region0: #{tpu_custom_call.1}
  #allocation0 [shape = 'u32[]', space=smem, size = 0x4, offset = 0x4, fixed_abs, tag = 'smem constant byte address 0x4 - core index']
  #allocation1 [shape = 'u32[144,128]{1,0:T(1,128)}', space=vmem, size = 0x12000, scoped, tag = 'internal scratch']
  #allocation2 [shape = 'f32[8,32]{1,0:T(8,128)}', space=vmem, size = 0x1000, scoped, tag = 'scratch operand']
  %s0 = inlined_call_operand.vmem [shape: f32[8,4], index: 0, kind: input, shape index: {}]
  %s1 = inlined_call_operand.hbm [shape: bf16[4,32], index: 1, kind: input, shape index: {}]
  %s2 = inlined_call_operand.hbm [shape: f32[1,32], index: 2, kind: input, shape index: {}]
  %s3 = inlined_call_operand.vmem [shape: bf16[32,32], index: 3, kind: input, shape index: {}]
  %s4 = inlined_call_operand.hbm [shape: f32[1,32], index: 4, kind: input, shape index: {}]
  %s5 = inlined_call_operand.hbm [shape: bf16[32,32], index: 5, kind: input, shape index: {}]
  %s6 = inlined_call_operand.hbm [shape: f32[1,32], index: 6, kind: input, shape index: {}]
  %s7 = inlined_call_operand.hbm [shape: bf16[32,32], index: 7, kind: input, shape index: {}]
  %s8 = inlined_call_operand.hbm [shape: f32[1,32], index: 8, kind: input, shape index: {}]
  %s9 = inlined_call_operand.hbm [shape: bf16[32,32], index: 9, kind: input, shape index: {}]
  %s10 = inlined_call_operand.hbm [shape: f32[1,32], index: 10, kind: input, shape index: {}]
  %s11 = inlined_call_operand.vmem [shape: bf16[32,32], index: 11, kind: input, shape index: {}]
  %s12 = inlined_call_operand.vmem [shape: f32[1,32], index: 12, kind: input, shape index: {}]
  %s13 = inlined_call_operand.hbm [shape: bf16[32,32], index: 13, kind: input, shape index: {}]
  %s14 = inlined_call_operand.vmem [shape: f32[1,32], index: 14, kind: input, shape index: {}]
  %s15 = inlined_call_operand.hbm [shape: bf16[32,32], index: 15, kind: input, shape index: {}]
  %s16 = inlined_call_operand.vmem [shape: f32[1,32], index: 16, kind: input, shape index: {}]
  %s17 = inlined_call_operand.hbm [shape: bf16[32,32], index: 17, kind: input, shape index: {}]
  %s18 = inlined_call_operand.vmem [shape: f32[1,32], index: 18, kind: input, shape index: {}]
  %s19 = inlined_call_operand.hbm [shape: bf16[32,128], index: 19, kind: input, shape index: {}]
  %s20 = inlined_call_operand.hbm [shape: f32[8,128], index: 20, kind: output, shape index: {}]
  %s21 = sld [smem:[#allocation0]]
  $region146: #{tpu_custom_call.1} parent=0
    _
  %s23 = ssub.s32 1, %s21
  %s24 = scalar_select 0, %s23, %s21
  $region1: #{tpu_custom_call.1} parent=0
    #allocation3 [shape = 'u8[1024]{0}', space=vmem, size = 0x400, scoped, tag = 'input window, operand 1, single buffered']
    #allocation4 [shape = 's32[1]{0}', space=sflag, size = 0x4, scoped, tag = 'scoped memory for tpu_custom_call.1']
    #allocation5 [shape = 's32[1]{0}', space=sflag, size = 0x4, scoped, tag = 'scoped memory for tpu_custom_call.1']
    #allocation6 [shape = 'u8[512]{0}', space=vmem, size = 0x400, scoped, tag = 'input window, operand 2, single buffered']
    #allocation7 [shape = 's32[1]{0}', space=sflag, size = 0x4, scoped, tag = 'scoped memory for tpu_custom_call.1']
    #allocation8 [shape = 'u8[512]{0}', space=vmem, size = 0x400, scoped, tag = 'input window, operand 4, single buffered']
    #allocation9 [shape = 'u8[8192]{0}', space=vmem, size = 0x2000, scoped, tag = 'input window, operand 5, single buffered']
    #allocation10 [shape = 's32[1]{0}', space=sflag, size = 0x4, scoped, tag = 'scoped memory for tpu_custom_call.1']
    #allocation11 [shape = 'u8[512]{0}', space=vmem, size = 0x400, scoped, tag = 'input window, operand 6, single buffered']
    #allocation12 [shape = 'u8[8192]{0}', space=vmem, size = 0x2000, scoped, tag = 'input window, operand 7, single buffered']
    #allocation13 [shape = 's32[1]{0}', space=sflag, size = 0x4, scoped, tag = 'scoped memory for tpu_custom_call.1']
    #allocation14 [shape = 'u8[512]{0}', space=vmem, size = 0x400, scoped, tag = 'input window, operand 8, single buffered']
    #allocation15 [shape = 'u8[8192]{0}', space=vmem, size = 0x2000, scoped, tag = 'input window, operand 9, single buffered']
    #allocation16 [shape = 's32[1]{0}', space=sflag, size = 0x4, scoped, tag = 'scoped memory for tpu_custom_call.1']
    #allocation17 [shape = 'u8[512]{0}', space=vmem, size = 0x400, scoped, tag = 'input window, operand 10, single buffered']
    #allocation18 [shape = 'u8[8192]{0}', space=vmem, size = 0x2000, scoped, tag = 'input window, operand 13, single buffered']
    #allocation19 [shape = 's32[1]{0}', space=sflag, size = 0x4, scoped, tag = 'scoped memory for tpu_custom_call.1']
    #allocation20 [shape = 'u8[8192]{0}', space=vmem, size = 0x2000, scoped, tag = 'input window, operand 15, single buffered']
    #allocation21 [shape = 'u8[8192]{0}', space=vmem, size = 0x2000, scoped, tag = 'input window, operand 17, single buffered']
    #allocation22 [shape = 's32[1]{0}', space=sflag, size = 0x4, scoped, tag = 'scoped memory for tpu_custom_call.1']
    #allocation23 [shape = 'u8[8192]{0}', space=vmem, size = 0x2000, scoped, tag = 'input window, operand 19, single buffered']
    #allocation24 [shape = 'u8[4096]{0}', space=vmem, size = 0x1000, scoped, tag = 'output window, operand 0, single buffered']
    %25 = vsyncpa [#allocation4], 0
    %26 = vsyncpa [#allocation7], 0
    %27 = vsyncpa [#allocation10], 0
    %28 = vsyncpa [#allocation13], 0
    %29 = vsyncpa [#allocation16], 0
    %30 = vsyncpa [#allocation19], 0
    %31 = vsyncpa [#allocation22], 0
    %32 = vsyncpa [#allocation5], 0
    // Predicated region
    $region2: #{tpu_custom_call.1} parent=1 // pred_check
      _
    $region3: #{tpu_custom_call.1} parent=1 // pred_check_branch
      %34 = sbr.rel (0) target = $region5
    $region4: #{tpu_custom_call.1} parent=1 // pred_region
      _
    $region5: #{tpu_custom_call.1} parent=1 // pred_fallthru
      _
    // Predicated region
    $region6: #{tpu_custom_call.1} parent=1 // pred_check
      _
    $region7: #{tpu_custom_call.1} parent=1 // pred_check_branch
      %36 = sbr.rel (0) target = $region9
    $region8: #{tpu_custom_call.1} parent=1 // pred_region
      %s38 = ssub.s32 32, 32
      %39 = vsyncadd [#allocation4], %s38
      %s41 = sshll.u32 [#allocation3], 4
      %s42 = int_to_ptr.vmem [resolvable:$true] %s41
      %44 = dma.hbm_to_vmem [thread:$0]  %s1, 32, %s42, [#allocation4]
    $region9: #{tpu_custom_call.1} parent=1 // pred_fallthru
      _
    // Predicated region
    $region10: #{tpu_custom_call.1} parent=1 // pred_check
      _
    $region11: #{tpu_custom_call.1} parent=1 // pred_check_branch
      %46 = sbr.rel (0) target = $region13
    $region12: #{tpu_custom_call.1} parent=1 // pred_region
      %s48 = ssub.s32 16, 16
      %49 = vsyncadd [#allocation7], %s48
      %s51 = sshll.u32 [#allocation6], 4
      %s52 = int_to_ptr.vmem [resolvable:$true] %s51
      %54 = dma.hbm_to_vmem [thread:$0]  %s2, 16, %s52, [#allocation7]
    $region13: #{tpu_custom_call.1} parent=1 // pred_fallthru
      _
    // Predicated region
    $region14: #{tpu_custom_call.1} parent=1 // pred_check
      _
    $region15: #{tpu_custom_call.1} parent=1 // pred_check_branch
      %56 = sbr.rel (0) target = $region17
    $region16: #{tpu_custom_call.1} parent=1 // pred_region
      _
    $region17: #{tpu_custom_call.1} parent=1 // pred_fallthru
      _
    // Predicated region
    $region18: #{tpu_custom_call.1} parent=1 // pred_check
      _
    $region19: #{tpu_custom_call.1} parent=1 // pred_check_branch
      %58 = sbr.rel (0) target = $region21
    $region20: #{tpu_custom_call.1} parent=1 // pred_region
      %s60 = ssub.s32 16, 16
      %61 = vsyncadd [#allocation7], %s60
      %s63 = sshll.u32 [#allocation8], 4
      %s64 = int_to_ptr.vmem [resolvable:$true] %s63
      %66 = dma.hbm_to_vmem [thread:$0]  %s4, 16, %s64, [#allocation7]
    $region21: #{tpu_custom_call.1} parent=1 // pred_fallthru
      _
    // Predicated region
    $region22: #{tpu_custom_call.1} parent=1 // pred_check
      _
    $region23: #{tpu_custom_call.1} parent=1 // pred_check_branch
      %68 = sbr.rel (0) target = $region25
    $region24: #{tpu_custom_call.1} parent=1 // pred_region
      %s70 = ssub.s32 256, 256
      %71 = vsyncadd [#allocation10], %s70
      %s72 = sshll.u32 [#allocation9], 4
      %s73 = int_to_ptr.vmem [resolvable:$true] %s72
      %78 = dma.hbm_to_vmem [thread:$0]  %s5, 256, %s73, [#allocation10], 64, 64, 4
    $region25: #{tpu_custom_call.1} parent=1 // pred_fallthru
      _
    // Predicated region
    $region26: #{tpu_custom_call.1} parent=1 // pred_check
      _
    $region27: #{tpu_custom_call.1} parent=1 // pred_check_branch
      %80 = sbr.rel (0) target = $region29
    $region28: #{tpu_custom_call.1} parent=1 // pred_region
      %s82 = ssub.s32 16, 16
      %83 = vsyncadd [#allocation10], %s82
      %s85 = sshll.u32 [#allocation11], 4
      %s86 = int_to_ptr.vmem [resolvable:$true] %s85
      %88 = dma.hbm_to_vmem [thread:$0]  %s6, 16, %s86, [#allocation10]
    $region29: #{tpu_custom_call.1} parent=1 // pred_fallthru
      _
    // Predicated region
    $region30: #{tpu_custom_call.1} parent=1 // pred_check
      _
    $region31: #{tpu_custom_call.1} parent=1 // pred_check_branch
      %90 = sbr.rel (0) target = $region33
    $region32: #{tpu_custom_call.1} parent=1 // pred_region
      %s92 = ssub.s32 256, 256
      %93 = vsyncadd [#allocation13], %s92
      %s94 = sshll.u32 [#allocation12], 4
      %s95 = int_to_ptr.vmem [resolvable:$true] %s94
      %100 = dma.hbm_to_vmem [thread:$0]  %s7, 256, %s95, [#allocation13], 64, 64, 4
    $region33: #{tpu_custom_call.1} parent=1 // pred_fallthru
      _
    // Predicated region
    $region34: #{tpu_custom_call.1} parent=1 // pred_check
      _
    $region35: #{tpu_custom_call.1} parent=1 // pred_check_branch
      %102 = sbr.rel (0) target = $region37
    $region36: #{tpu_custom_call.1} parent=1 // pred_region
      %s104 = ssub.s32 16, 16
      %105 = vsyncadd [#allocation13], %s104
      %s107 = sshll.u32 [#allocation14], 4
      %s108 = int_to_ptr.vmem [resolvable:$true] %s107
      %110 = dma.hbm_to_vmem [thread:$0]  %s8, 16, %s108, [#allocation13]
    $region37: #{tpu_custom_call.1} parent=1 // pred_fallthru
      _
    // Predicated region
    $region38: #{tpu_custom_call.1} parent=1 // pred_check
      _
    $region39: #{tpu_custom_call.1} parent=1 // pred_check_branch
      %112 = sbr.rel (0) target = $region41
    $region40: #{tpu_custom_call.1} parent=1 // pred_region
      %s114 = ssub.s32 256, 256
      %115 = vsyncadd [#allocation16], %s114
      %s116 = sshll.u32 [#allocation15], 4
      %s117 = int_to_ptr.vmem [resolvable:$true] %s116
      %122 = dma.hbm_to_vmem [thread:$0]  %s9, 256, %s117, [#allocation16], 64, 64, 4
    $region41: #{tpu_custom_call.1} parent=1 // pred_fallthru
      _
    // Predicated region
    $region42: #{tpu_custom_call.1} parent=1 // pred_check
      _
    $region43: #{tpu_custom_call.1} parent=1 // pred_check_branch
      %124 = sbr.rel (0) target = $region45
    $region44: #{tpu_custom_call.1} parent=1 // pred_region
      %s126 = ssub.s32 16, 16
      %127 = vsyncadd [#allocation16], %s126
      %s129 = sshll.u32 [#allocation17], 4
      %s130 = int_to_ptr.vmem [resolvable:$true] %s129
      %132 = dma.hbm_to_vmem [thread:$0]  %s10, 16, %s130, [#allocation16]
    $region45: #{tpu_custom_call.1} parent=1 // pred_fallthru
      _
    // Predicated region
    $region46: #{tpu_custom_call.1} parent=1 // pred_check
      _
    $region47: #{tpu_custom_call.1} parent=1 // pred_check_branch
      %134 = sbr.rel (0) target = $region49
    $region48: #{tpu_custom_call.1} parent=1 // pred_region
      _
    $region49: #{tpu_custom_call.1} parent=1 // pred_fallthru
      _
    // Predicated region
    $region50: #{tpu_custom_call.1} parent=1 // pred_check
      _
    $region51: #{tpu_custom_call.1} parent=1 // pred_check_branch
      %136 = sbr.rel (0) target = $region53
    $region52: #{tpu_custom_call.1} parent=1 // pred_region
      _
    $region53: #{tpu_custom_call.1} parent=1 // pred_fallthru
      _
    // Predicated region
    $region54: #{tpu_custom_call.1} parent=1 // pred_check
      _
    $region55: #{tpu_custom_call.1} parent=1 // pred_check_branch
      %138 = sbr.rel (0) target = $region57
    $region56: #{tpu_custom_call.1} parent=1 // pred_region
      %s140 = ssub.s32 256, 256
      %141 = vsyncadd [#allocation19], %s140
      %s142 = sshll.u32 [#allocation18], 4
      %s143 = int_to_ptr.vmem [resolvable:$true] %s142
      %148 = dma.hbm_to_vmem [thread:$0]  %s13, 256, %s143, [#allocation19], 64, 64, 4
    $region57: #{tpu_custom_call.1} parent=1 // pred_fallthru
      _
    // Predicated region
    $region58: #{tpu_custom_call.1} parent=1 // pred_check
      _
    $region59: #{tpu_custom_call.1} parent=1 // pred_check_branch
      %150 = sbr.rel (0) target = $region61
    $region60: #{tpu_custom_call.1} parent=1 // pred_region
      _
    $region61: #{tpu_custom_call.1} parent=1 // pred_fallthru
      _
    // Predicated region
    $region62: #{tpu_custom_call.1} parent=1 // pred_check
      _
    $region63: #{tpu_custom_call.1} parent=1 // pred_check_branch
      %152 = sbr.rel (0) target = $region65
    $region64: #{tpu_custom_call.1} parent=1 // pred_region
      %s154 = ssub.s32 256, 256
      %155 = vsyncadd [#allocation19], %s154
      %s156 = sshll.u32 [#allocation20], 4
      %s157 = int_to_ptr.vmem [resolvable:$true] %s156
      %162 = dma.hbm_to_vmem [thread:$0]  %s15, 256, %s157, [#allocation19], 64, 64, 4
    $region65: #{tpu_custom_call.1} parent=1 // pred_fallthru
      _
    // Predicated region
    $region66: #{tpu_custom_call.1} parent=1 // pred_check
      _
    $region67: #{tpu_custom_call.1} parent=1 // pred_check_branch
      %164 = sbr.rel (0) target = $region69
    $region68: #{tpu_custom_call.1} parent=1 // pred_region
      _
    $region69: #{tpu_custom_call.1} parent=1 // pred_fallthru
      _
    // Predicated region
    $region70: #{tpu_custom_call.1} parent=1 // pred_check
      _
    $region71: #{tpu_custom_call.1} parent=1 // pred_check_branch
      %166 = sbr.rel (0) target = $region73
    $region72: #{tpu_custom_call.1} parent=1 // pred_region
      %s168 = ssub.s32 256, 256
      %169 = vsyncadd [#allocation22], %s168
      %s170 = sshll.u32 [#allocation21], 4
      %s171 = int_to_ptr.vmem [resolvable:$true] %s170
      %176 = dma.hbm_to_vmem [thread:$0]  %s17, 256, %s171, [#allocation22], 64, 64, 4
    $region73: #{tpu_custom_call.1} parent=1 // pred_fallthru
      _
    // Predicated region
    $region74: #{tpu_custom_call.1} parent=1 // pred_check
      _
    $region75: #{tpu_custom_call.1} parent=1 // pred_check_branch
      %178 = sbr.rel (0) target = $region77
    $region76: #{tpu_custom_call.1} parent=1 // pred_region
      _
    $region77: #{tpu_custom_call.1} parent=1 // pred_fallthru
      _
    // Predicated region
    $region78: #{tpu_custom_call.1} parent=1 // pred_check
      _
    $region79: #{tpu_custom_call.1} parent=1 // pred_check_branch
      %180 = sbr.rel (0) target = $region81
    $region80: #{tpu_custom_call.1} parent=1 // pred_region
      %s182 = ssub.s32 256, 256
      %183 = vsyncadd [#allocation22], %s182
      %s184 = sshll.u32 [#allocation23], 4
      %s185 = int_to_ptr.vmem [resolvable:$true] %s184
      %190 = dma.hbm_to_vmem [thread:$0]  %s19, 256, %s185, [#allocation22], 64, 64, 4
    $region81: #{tpu_custom_call.1} parent=1 // pred_fallthru
      _
    // Predicated region
    $region82: #{tpu_custom_call.1} parent=1 // pred_check
      _
    $region83: #{tpu_custom_call.1} parent=1 // pred_check_branch
      %192 = sbr.rel (0) target = $region85
    $region84: #{tpu_custom_call.1} parent=1 // pred_region
      %193 = dma.done [#allocation4], 32
    $region85: #{tpu_custom_call.1} parent=1 // pred_fallthru
      _
    // Predicated region
    $region86: #{tpu_custom_call.1} parent=1 // pred_check
      _
    $region87: #{tpu_custom_call.1} parent=1 // pred_check_branch
      %195 = sbr.rel (0) target = $region89
    $region88: #{tpu_custom_call.1} parent=1 // pred_region
      %196 = dma.done [#allocation7], 16
    $region89: #{tpu_custom_call.1} parent=1 // pred_fallthru
      _
    // Predicated region
    $region90: #{tpu_custom_call.1} parent=1 // pred_check
      _
    $region91: #{tpu_custom_call.1} parent=1 // pred_check_branch
      %198 = sbr.rel (0) target = $region93
    $region92: #{tpu_custom_call.1} parent=1 // pred_region
      %199 = dma.done [#allocation7], 16
    $region93: #{tpu_custom_call.1} parent=1 // pred_fallthru
      _
    // Predicated region
    $region94: #{tpu_custom_call.1} parent=1 // pred_check
      _
    $region95: #{tpu_custom_call.1} parent=1 // pred_check_branch
      %201 = sbr.rel (0) target = $region97
    $region96: #{tpu_custom_call.1} parent=1 // pred_region
      %202 = dma.done [#allocation10], 256
    $region97: #{tpu_custom_call.1} parent=1 // pred_fallthru
      _
    // Predicated region
    $region98: #{tpu_custom_call.1} parent=1 // pred_check
      _
    $region99: #{tpu_custom_call.1} parent=1 // pred_check_branch
      %204 = sbr.rel (0) target = $region101
    $region100: #{tpu_custom_call.1} parent=1 // pred_region
      %205 = dma.done [#allocation10], 16
    $region101: #{tpu_custom_call.1} parent=1 // pred_fallthru
      _
    // Predicated region
    $region102: #{tpu_custom_call.1} parent=1 // pred_check
      _
    $region103: #{tpu_custom_call.1} parent=1 // pred_check_branch
      %207 = sbr.rel (0) target = $region105
    $region104: #{tpu_custom_call.1} parent=1 // pred_region
      %208 = dma.done [#allocation13], 256
    $region105: #{tpu_custom_call.1} parent=1 // pred_fallthru
      _
    // Predicated region
    $region106: #{tpu_custom_call.1} parent=1 // pred_check
      _
    $region107: #{tpu_custom_call.1} parent=1 // pred_check_branch
      %210 = sbr.rel (0) target = $region109
    $region108: #{tpu_custom_call.1} parent=1 // pred_region
      %211 = dma.done [#allocation13], 16
    $region109: #{tpu_custom_call.1} parent=1 // pred_fallthru
      _
    // Predicated region
    $region110: #{tpu_custom_call.1} parent=1 // pred_check
      _
    $region111: #{tpu_custom_call.1} parent=1 // pred_check_branch
      %213 = sbr.rel (0) target = $region113
    $region112: #{tpu_custom_call.1} parent=1 // pred_region
      %214 = dma.done [#allocation16], 256
    $region113: #{tpu_custom_call.1} parent=1 // pred_fallthru
      _
    // Predicated region
    $region114: #{tpu_custom_call.1} parent=1 // pred_check
      _
    $region115: #{tpu_custom_call.1} parent=1 // pred_check_branch
      %216 = sbr.rel (0) target = $region117
    $region116: #{tpu_custom_call.1} parent=1 // pred_region
      %217 = dma.done [#allocation16], 16
    $region117: #{tpu_custom_call.1} parent=1 // pred_fallthru
      _
    // Predicated region
    $region118: #{tpu_custom_call.1} parent=1 // pred_check
      _
    $region119: #{tpu_custom_call.1} parent=1 // pred_check_branch
      %219 = sbr.rel (0) target = $region121
    $region120: #{tpu_custom_call.1} parent=1 // pred_region
      %220 = dma.done [#allocation19], 256
    $region121: #{tpu_custom_call.1} parent=1 // pred_fallthru
      _
    // Predicated region
    $region122: #{tpu_custom_call.1} parent=1 // pred_check
      _
    $region123: #{tpu_custom_call.1} parent=1 // pred_check_branch
      %222 = sbr.rel (0) target = $region125
    $region124: #{tpu_custom_call.1} parent=1 // pred_region
      %223 = dma.done [#allocation19], 256
    $region125: #{tpu_custom_call.1} parent=1 // pred_fallthru
      _
    // Predicated region
    $region126: #{tpu_custom_call.1} parent=1 // pred_check
      _
    $region127: #{tpu_custom_call.1} parent=1 // pred_check_branch
      %225 = sbr.rel (0) target = $region129
    $region128: #{tpu_custom_call.1} parent=1 // pred_region
      %226 = dma.done [#allocation22], 256
    $region129: #{tpu_custom_call.1} parent=1 // pred_fallthru
      _
    // Predicated region
    $region130: #{tpu_custom_call.1} parent=1 // pred_check
      _
    $region131: #{tpu_custom_call.1} parent=1 // pred_check_branch
      %228 = sbr.rel (0) target = $region133
    $region132: #{tpu_custom_call.1} parent=1 // pred_region
      %229 = dma.done [#allocation22], 256
    $region133: #{tpu_custom_call.1} parent=1 // pred_fallthru
      _
    %p231 = scmp.eq.s32.totalorder 0, 0
    // Predicated region
    $region134: #{tpu_custom_call.1} parent=1 // pred_check
      %p232 = pneg %p231
    $region135: #{tpu_custom_call.1} parent=1 // pred_check_branch
      %234 = sbr.rel (%p232) target = $region137
    $region136: #{tpu_custom_call.1} parent=1 // pred_region
      %v235 = vld [vmem:[%s0] sm:$0xff]
      %v236 = vpack.c.bf16 %v235, %v235
      %v237 = vld [vmem:[#allocation3] sm:$0x3]
      %v238 = vld [vmem:[#allocation6] sm:$0x1]
      %v240 = vlaneseq
      %v241 = vshrl.u32 %v240, 7
      %v242 = vsub.s32 0, %v241
      %v243 = vrot.slane %v238, %v242
      %vm245 = vcmask 31744
      %v247 = vsel %vm245, %v236, 0
      %vm249 = vcmask 1041408
      %v251 = vsel %vm249, %v237, 0
      %253 = vmatprep.subr.bf16.mxu0 0
      %254 = vmatpush1.bf16.msra.mxu0 0
      %255 = vmatprep.subr.bf16.mxu0 0
      %256 = vmatpush1.bf16.msra.mxu0 0
      %257 = vmatprep.subr.bf16.mxu0 0
      %258 = vmatpush1.bf16.msra.mxu0 0
      %259 = vmatprep.subr.bf16.mxu0 0
      %260 = vmatpush1.bf16.msra.mxu0 0
      %261 = vmatprep.subr.bf16.mxu0 0
      %262 = vmatpush1.bf16.msra.mxu0 0
      %263 = vmatprep.subr.bf16.mxu0 0
      %264 = vmatpush1.bf16.msra.mxu0 0
      %265 = vmatprep.subr.bf16.mxu0 0
      %266 = vmatpush1.bf16.msra.mxu0 0
      %267 = vmatprep.subr.bf16.mxu0 0
      %268 = vmatpush1.bf16.msra.mxu0 %v251
      %269 = vmatprep.subr.bf16.mxu0 0
      %270 = vmatpush2.bf16.msra.mxu0 0
      %271 = vmatprep.subr.bf16.mxu0 0
      %272 = vmatpush2.bf16.msra.mxu0 0
      %273 = vmatprep.subr.bf16.mxu0 0
      %274 = vmatpush2.bf16.msra.mxu0 0
      %275 = vmatprep.subr.bf16.mxu0 0
      %276 = vmatpush2.bf16.msra.mxu0 0
      %277 = vmatprep.subr.bf16.mxu0 0
      %278 = vmatpush2.bf16.msra.mxu0 0
      %279 = vmatprep.subr.bf16.mxu0 0
      %280 = vmatpush2.bf16.msra.mxu0 0
      %281 = vmatprep.subr.bf16.mxu0 0
      %282 = vmatpush2.bf16.msra.mxu0 0
      %283 = vmatprep.subr.bf16.mxu0 0
      %284 = vmatpush2.bf16.msra.mxu0 0
      %285 = vmatprep.mubr.bf16.mxu0 0
      %286 = vmatmul.mubr.bf16.gmra.mxu0 %v247
      %v287 = vpop.f32.mrf.mxu0
      %v288 = vadd.f32 %v243, %v287
      %v289 = vpop.f32.mrf.mxu0
      %v290 = vpop.f32.mrf.mxu0
      %v291 = vpop.f32.mrf.mxu0
      %292 = vdwg.mxu0
      %v293 = vmax.f32 %v288, 0.0
      %v294 = vpack.c.bf16 %v293, %v293
      %v295 = vld [vmem:[%s3] sm:$0xf]
      %v296 = vld [vmem:[%s3 + $0x4] sm:$0xf]
      %v297 = vld [vmem:[%s3 + $0x8] sm:$0xf]
      %v298 = vld [vmem:[%s3 + $0xc] sm:$0xf]
      %v299 = vld [vmem:[#allocation8] sm:$0x1]
      %v301 = vlaneseq
      %v302 = vshrl.u32 %v301, 7
      %v303 = vsub.s32 0, %v302
      %v304 = vrot.slane %v299, %v303
      %v310 = vunpack.c.l.b16 %v295
      %v311 = vunpack.c.l.b16 %v296
      %v312 = vunpack.c.l.b16 %v297
      %v313 = vunpack.c.l.b16 %v298
      %v314 = vpack.c.b16 %v311, %v310
      %v315 = vpack.c.b16 %v313, %v312
      %vm318 = vcmask 261120
      %v320 = vsel %vm318, %v294, 0
      %322 = vmatprep.subr.bf16.mxu0 0
      %323 = vmatpush1.bf16.msra.mxu0 0
      %324 = vmatprep.subr.bf16.mxu0 0
      %325 = vmatpush1.bf16.msra.mxu0 0
      %326 = vmatprep.subr.bf16.mxu0 0
      %327 = vmatpush1.bf16.msra.mxu0 0
      %328 = vmatprep.subr.bf16.mxu0 0
      %329 = vmatpush1.bf16.msra.mxu0 0
      %330 = vmatprep.subr.bf16.mxu0 0
      %331 = vmatpush1.bf16.msra.mxu0 0
      %332 = vmatprep.subr.bf16.mxu0 0
      %333 = vmatpush1.bf16.msra.mxu0 0
      %334 = vmatprep.subr.bf16.mxu0 0
      %335 = vmatpush1.bf16.msra.mxu0 %v315
      %336 = vmatprep.subr.bf16.mxu0 0
      %337 = vmatpush1.bf16.msra.mxu0 %v314
      %338 = vmatprep.subr.bf16.mxu0 0
      %339 = vmatpush2.bf16.msra.mxu0 0
      %340 = vmatprep.subr.bf16.mxu0 0
      %341 = vmatpush2.bf16.msra.mxu0 0
      %342 = vmatprep.subr.bf16.mxu0 0
      %343 = vmatpush2.bf16.msra.mxu0 0
      %344 = vmatprep.subr.bf16.mxu0 0
      %345 = vmatpush2.bf16.msra.mxu0 0
      %346 = vmatprep.subr.bf16.mxu0 0
      %347 = vmatpush2.bf16.msra.mxu0 0
      %348 = vmatprep.subr.bf16.mxu0 0
      %349 = vmatpush2.bf16.msra.mxu0 0
      %350 = vmatprep.subr.bf16.mxu0 0
      %351 = vmatpush2.bf16.msra.mxu0 0
      %352 = vmatprep.subr.bf16.mxu0 0
      %353 = vmatpush2.bf16.msra.mxu0 0
      %354 = vmatprep.mubr.bf16.mxu0 0
      %355 = vmatmul.mubr.bf16.gmra.mxu0 %v320
      %v356 = vpop.f32.mrf.mxu0
      %v357 = vadd.f32 %v304, %v356
      %v358 = vpop.f32.mrf.mxu0
      %v359 = vpop.f32.mrf.mxu0
      %v360 = vpop.f32.mrf.mxu0
      %361 = vdwg.mxu0
      %v362 = vmax.f32 %v357, 0.0
      %v363 = vpack.c.bf16 %v362, %v362
      %v364 = vld [vmem:[#allocation9] sm:$0xf]
      %v365 = vld [vmem:[#allocation9 + $0x4] sm:$0xf]
      %v366 = vld [vmem:[#allocation9 + $0x8] sm:$0xf]
      %v367 = vld [vmem:[#allocation9 + $0xc] sm:$0xf]
      %v368 = vld [vmem:[#allocation11] sm:$0x1]
      %v370 = vlaneseq
      %v371 = vshrl.u32 %v370, 7
      %v372 = vsub.s32 0, %v371
      %v373 = vrot.slane %v368, %v372
      %v379 = vunpack.c.l.b16 %v364
      %v380 = vunpack.c.l.b16 %v365
      %v381 = vunpack.c.l.b16 %v366
      %v382 = vunpack.c.l.b16 %v367
      %v383 = vpack.c.b16 %v380, %v379
      %v384 = vpack.c.b16 %v382, %v381
      %v388 = vsel %vm318, %v363, 0
      %390 = vmatprep.subr.bf16.mxu0 0
      %391 = vmatpush1.bf16.msra.mxu0 0
      %392 = vmatprep.subr.bf16.mxu0 0
      %393 = vmatpush1.bf16.msra.mxu0 0
      %394 = vmatprep.subr.bf16.mxu0 0
      %395 = vmatpush1.bf16.msra.mxu0 0
      %396 = vmatprep.subr.bf16.mxu0 0
      %397 = vmatpush1.bf16.msra.mxu0 0
      %398 = vmatprep.subr.bf16.mxu0 0
      %399 = vmatpush1.bf16.msra.mxu0 0
      %400 = vmatprep.subr.bf16.mxu0 0
      %401 = vmatpush1.bf16.msra.mxu0 0
      %402 = vmatprep.subr.bf16.mxu0 0
      %403 = vmatpush1.bf16.msra.mxu0 %v384
      %404 = vmatprep.subr.bf16.mxu0 0
      %405 = vmatpush1.bf16.msra.mxu0 %v383
      %406 = vmatprep.subr.bf16.mxu0 0
      %407 = vmatpush2.bf16.msra.mxu0 0
      %408 = vmatprep.subr.bf16.mxu0 0
      %409 = vmatpush2.bf16.msra.mxu0 0
      %410 = vmatprep.subr.bf16.mxu0 0
      %411 = vmatpush2.bf16.msra.mxu0 0
      %412 = vmatprep.subr.bf16.mxu0 0
      %413 = vmatpush2.bf16.msra.mxu0 0
      %414 = vmatprep.subr.bf16.mxu0 0
      %415 = vmatpush2.bf16.msra.mxu0 0
      %416 = vmatprep.subr.bf16.mxu0 0
      %417 = vmatpush2.bf16.msra.mxu0 0
      %418 = vmatprep.subr.bf16.mxu0 0
      %419 = vmatpush2.bf16.msra.mxu0 0
      %420 = vmatprep.subr.bf16.mxu0 0
      %421 = vmatpush2.bf16.msra.mxu0 0
      %422 = vmatprep.mubr.bf16.mxu0 0
      %423 = vmatmul.mubr.bf16.gmra.mxu0 %v388
      %v424 = vpop.f32.mrf.mxu0
      %v425 = vadd.f32 %v373, %v424
      %v426 = vpop.f32.mrf.mxu0
      %v427 = vpop.f32.mrf.mxu0
      %v428 = vpop.f32.mrf.mxu0
      %429 = vdwg.mxu0
      %v430 = vmax.f32 %v425, 0.0
      %v431 = vadd.f32 %v293, %v430
      %v432 = vpack.c.bf16 %v431, %v431
      %v433 = vld [vmem:[#allocation12] sm:$0xf]
      %v434 = vld [vmem:[#allocation12 + $0x4] sm:$0xf]
      %v435 = vld [vmem:[#allocation12 + $0x8] sm:$0xf]
      %v436 = vld [vmem:[#allocation12 + $0xc] sm:$0xf]
      %v437 = vld [vmem:[#allocation14] sm:$0x1]
      %v439 = vlaneseq
      %v440 = vshrl.u32 %v439, 7
      %v441 = vsub.s32 0, %v440
      %v442 = vrot.slane %v437, %v441
      %v448 = vunpack.c.l.b16 %v433
      %v449 = vunpack.c.l.b16 %v434
      %v450 = vunpack.c.l.b16 %v435
      %v451 = vunpack.c.l.b16 %v436
      %v452 = vpack.c.b16 %v449, %v448
      %v453 = vpack.c.b16 %v451, %v450
      %v457 = vsel %vm318, %v432, 0
      %459 = vmatprep.subr.bf16.mxu0 0
      %460 = vmatpush1.bf16.msra.mxu0 0
      %461 = vmatprep.subr.bf16.mxu0 0
      %462 = vmatpush1.bf16.msra.mxu0 0
      %463 = vmatprep.subr.bf16.mxu0 0
      %464 = vmatpush1.bf16.msra.mxu0 0
      %465 = vmatprep.subr.bf16.mxu0 0
      %466 = vmatpush1.bf16.msra.mxu0 0
      %467 = vmatprep.subr.bf16.mxu0 0
      %468 = vmatpush1.bf16.msra.mxu0 0
      %469 = vmatprep.subr.bf16.mxu0 0
      %470 = vmatpush1.bf16.msra.mxu0 0
      %471 = vmatprep.subr.bf16.mxu0 0
      %472 = vmatpush1.bf16.msra.mxu0 %v453
      %473 = vmatprep.subr.bf16.mxu0 0
      %474 = vmatpush1.bf16.msra.mxu0 %v452
      %475 = vmatprep.subr.bf16.mxu0 0
      %476 = vmatpush2.bf16.msra.mxu0 0
      %477 = vmatprep.subr.bf16.mxu0 0
      %478 = vmatpush2.bf16.msra.mxu0 0
      %479 = vmatprep.subr.bf16.mxu0 0
      %480 = vmatpush2.bf16.msra.mxu0 0
      %481 = vmatprep.subr.bf16.mxu0 0
      %482 = vmatpush2.bf16.msra.mxu0 0
      %483 = vmatprep.subr.bf16.mxu0 0
      %484 = vmatpush2.bf16.msra.mxu0 0
      %485 = vmatprep.subr.bf16.mxu0 0
      %486 = vmatpush2.bf16.msra.mxu0 0
      %487 = vmatprep.subr.bf16.mxu0 0
      %488 = vmatpush2.bf16.msra.mxu0 0
      %489 = vmatprep.subr.bf16.mxu0 0
      %490 = vmatpush2.bf16.msra.mxu0 0
      %491 = vmatprep.mubr.bf16.mxu0 0
      %492 = vmatmul.mubr.bf16.gmra.mxu0 %v457
      %v493 = vpop.f32.mrf.mxu0
      %v494 = vadd.f32 %v442, %v493
      %v495 = vpop.f32.mrf.mxu0
      %v496 = vpop.f32.mrf.mxu0
      %v497 = vpop.f32.mrf.mxu0
      %498 = vdwg.mxu0
      %v499 = vmax.f32 %v494, 0.0
      %v500 = vpack.c.bf16 %v499, %v499
      %v501 = vld [vmem:[#allocation15] sm:$0xf]
      %v502 = vld [vmem:[#allocation15 + $0x4] sm:$0xf]
      %v503 = vld [vmem:[#allocation15 + $0x8] sm:$0xf]
      %v504 = vld [vmem:[#allocation15 + $0xc] sm:$0xf]
      %v505 = vld [vmem:[#allocation17] sm:$0x1]
      %v507 = vlaneseq
      %v508 = vshrl.u32 %v507, 7
      %v509 = vsub.s32 0, %v508
      %v510 = vrot.slane %v505, %v509
      %v516 = vunpack.c.l.b16 %v501
      %v517 = vunpack.c.l.b16 %v502
      %v518 = vunpack.c.l.b16 %v503
      %v519 = vunpack.c.l.b16 %v504
      %v520 = vpack.c.b16 %v517, %v516
      %v521 = vpack.c.b16 %v519, %v518
      %v525 = vsel %vm318, %v500, 0
      %527 = vmatprep.subr.bf16.mxu0 0
      %528 = vmatpush1.bf16.msra.mxu0 0
      %529 = vmatprep.subr.bf16.mxu0 0
      %530 = vmatpush1.bf16.msra.mxu0 0
      %531 = vmatprep.subr.bf16.mxu0 0
      %532 = vmatpush1.bf16.msra.mxu0 0
      %533 = vmatprep.subr.bf16.mxu0 0
      %534 = vmatpush1.bf16.msra.mxu0 0
      %535 = vmatprep.subr.bf16.mxu0 0
      %536 = vmatpush1.bf16.msra.mxu0 0
      %537 = vmatprep.subr.bf16.mxu0 0
      %538 = vmatpush1.bf16.msra.mxu0 0
      %539 = vmatprep.subr.bf16.mxu0 0
      %540 = vmatpush1.bf16.msra.mxu0 %v521
      %541 = vmatprep.subr.bf16.mxu0 0
      %542 = vmatpush1.bf16.msra.mxu0 %v520
      %543 = vmatprep.subr.bf16.mxu0 0
      %544 = vmatpush2.bf16.msra.mxu0 0
      %545 = vmatprep.subr.bf16.mxu0 0
      %546 = vmatpush2.bf16.msra.mxu0 0
      %547 = vmatprep.subr.bf16.mxu0 0
      %548 = vmatpush2.bf16.msra.mxu0 0
      %549 = vmatprep.subr.bf16.mxu0 0
      %550 = vmatpush2.bf16.msra.mxu0 0
      %551 = vmatprep.subr.bf16.mxu0 0
      %552 = vmatpush2.bf16.msra.mxu0 0
      %553 = vmatprep.subr.bf16.mxu0 0
      %554 = vmatpush2.bf16.msra.mxu0 0
      %555 = vmatprep.subr.bf16.mxu0 0
      %556 = vmatpush2.bf16.msra.mxu0 0
      %557 = vmatprep.subr.bf16.mxu0 0
      %558 = vmatpush2.bf16.msra.mxu0 0
      %559 = vmatprep.mubr.bf16.mxu0 0
      %560 = vmatmul.mubr.bf16.gmra.mxu0 %v525
      %v561 = vpop.f32.mrf.mxu0
      %v562 = vadd.f32 %v510, %v561
      %v563 = vpop.f32.mrf.mxu0
      %v564 = vpop.f32.mrf.mxu0
      %v565 = vpop.f32.mrf.mxu0
      %566 = vdwg.mxu0
      %v567 = vmax.f32 %v562, 0.0
      %v568 = vadd.f32 %v431, %v567
      %v569 = vpack.c.bf16 %v568, %v568
      %v570 = vld [vmem:[%s11] sm:$0xf]
      %v571 = vld [vmem:[%s11 + $0x4] sm:$0xf]
      %v572 = vld [vmem:[%s11 + $0x8] sm:$0xf]
      %v573 = vld [vmem:[%s11 + $0xc] sm:$0xf]
      %v574 = vld [vmem:[%s12] sm:$0x1]
      %v576 = vlaneseq
      %v577 = vshrl.u32 %v576, 7
      %v578 = vsub.s32 0, %v577
      %v579 = vrot.slane %v574, %v578
      %v585 = vunpack.c.l.b16 %v570
      %v586 = vunpack.c.l.b16 %v571
      %v587 = vunpack.c.l.b16 %v572
      %v588 = vunpack.c.l.b16 %v573
      %v589 = vpack.c.b16 %v586, %v585
      %v590 = vpack.c.b16 %v588, %v587
      %v594 = vsel %vm318, %v569, 0
      %596 = vmatprep.subr.bf16.mxu0 0
      %597 = vmatpush1.bf16.msra.mxu0 0
      %598 = vmatprep.subr.bf16.mxu0 0
      %599 = vmatpush1.bf16.msra.mxu0 0
      %600 = vmatprep.subr.bf16.mxu0 0
      %601 = vmatpush1.bf16.msra.mxu0 0
      %602 = vmatprep.subr.bf16.mxu0 0
      %603 = vmatpush1.bf16.msra.mxu0 0
      %604 = vmatprep.subr.bf16.mxu0 0
      %605 = vmatpush1.bf16.msra.mxu0 0
      %606 = vmatprep.subr.bf16.mxu0 0
      %607 = vmatpush1.bf16.msra.mxu0 0
      %608 = vmatprep.subr.bf16.mxu0 0
      %609 = vmatpush1.bf16.msra.mxu0 %v590
      %610 = vmatprep.subr.bf16.mxu0 0
      %611 = vmatpush1.bf16.msra.mxu0 %v589
      %612 = vmatprep.subr.bf16.mxu0 0
      %613 = vmatpush2.bf16.msra.mxu0 0
      %614 = vmatprep.subr.bf16.mxu0 0
      %615 = vmatpush2.bf16.msra.mxu0 0
      %616 = vmatprep.subr.bf16.mxu0 0
      %617 = vmatpush2.bf16.msra.mxu0 0
      %618 = vmatprep.subr.bf16.mxu0 0
      %619 = vmatpush2.bf16.msra.mxu0 0
      %620 = vmatprep.subr.bf16.mxu0 0
      %621 = vmatpush2.bf16.msra.mxu0 0
      %622 = vmatprep.subr.bf16.mxu0 0
      %623 = vmatpush2.bf16.msra.mxu0 0
      %624 = vmatprep.subr.bf16.mxu0 0
      %625 = vmatpush2.bf16.msra.mxu0 0
      %626 = vmatprep.subr.bf16.mxu0 0
      %627 = vmatpush2.bf16.msra.mxu0 0
      %628 = vmatprep.mubr.bf16.mxu0 0
      %629 = vmatmul.mubr.bf16.gmra.mxu0 %v594
      %v630 = vpop.f32.mrf.mxu0
      %v631 = vadd.f32 %v579, %v630
      %v632 = vpop.f32.mrf.mxu0
      %v633 = vpop.f32.mrf.mxu0
      %v634 = vpop.f32.mrf.mxu0
      %635 = vdwg.mxu0
      %v636 = vmax.f32 %v631, 0.0
      %v637 = vpack.c.bf16 %v636, %v636
      %v638 = vld [vmem:[#allocation18] sm:$0xf]
      %v639 = vld [vmem:[#allocation18 + $0x4] sm:$0xf]
      %v640 = vld [vmem:[#allocation18 + $0x8] sm:$0xf]
      %v641 = vld [vmem:[#allocation18 + $0xc] sm:$0xf]
      %v642 = vld [vmem:[%s14] sm:$0x1]
      %v644 = vlaneseq
      %v645 = vshrl.u32 %v644, 7
      %v646 = vsub.s32 0, %v645
      %v647 = vrot.slane %v642, %v646
      %v653 = vunpack.c.l.b16 %v638
      %v654 = vunpack.c.l.b16 %v639
      %v655 = vunpack.c.l.b16 %v640
      %v656 = vunpack.c.l.b16 %v641
      %v657 = vpack.c.b16 %v654, %v653
      %v658 = vpack.c.b16 %v656, %v655
      %v662 = vsel %vm318, %v637, 0
      %664 = vmatprep.subr.bf16.mxu0 0
      %665 = vmatpush1.bf16.msra.mxu0 0
      %666 = vmatprep.subr.bf16.mxu0 0
      %667 = vmatpush1.bf16.msra.mxu0 0
      %668 = vmatprep.subr.bf16.mxu0 0
      %669 = vmatpush1.bf16.msra.mxu0 0
      %670 = vmatprep.subr.bf16.mxu0 0
      %671 = vmatpush1.bf16.msra.mxu0 0
      %672 = vmatprep.subr.bf16.mxu0 0
      %673 = vmatpush1.bf16.msra.mxu0 0
      %674 = vmatprep.subr.bf16.mxu0 0
      %675 = vmatpush1.bf16.msra.mxu0 0
      %676 = vmatprep.subr.bf16.mxu0 0
      %677 = vmatpush1.bf16.msra.mxu0 %v658
      %678 = vmatprep.subr.bf16.mxu0 0
      %679 = vmatpush1.bf16.msra.mxu0 %v657
      %680 = vmatprep.subr.bf16.mxu0 0
      %681 = vmatpush2.bf16.msra.mxu0 0
      %682 = vmatprep.subr.bf16.mxu0 0
      %683 = vmatpush2.bf16.msra.mxu0 0
      %684 = vmatprep.subr.bf16.mxu0 0
      %685 = vmatpush2.bf16.msra.mxu0 0
      %686 = vmatprep.subr.bf16.mxu0 0
      %687 = vmatpush2.bf16.msra.mxu0 0
      %688 = vmatprep.subr.bf16.mxu0 0
      %689 = vmatpush2.bf16.msra.mxu0 0
      %690 = vmatprep.subr.bf16.mxu0 0
      %691 = vmatpush2.bf16.msra.mxu0 0
      %692 = vmatprep.subr.bf16.mxu0 0
      %693 = vmatpush2.bf16.msra.mxu0 0
      %694 = vmatprep.subr.bf16.mxu0 0
      %695 = vmatpush2.bf16.msra.mxu0 0
      %696 = vmatprep.mubr.bf16.mxu0 0
      %697 = vmatmul.mubr.bf16.gmra.mxu0 %v662
      %v698 = vpop.f32.mrf.mxu0
      %v699 = vadd.f32 %v647, %v698
      %v700 = vpop.f32.mrf.mxu0
      %v701 = vpop.f32.mrf.mxu0
      %v702 = vpop.f32.mrf.mxu0
      %703 = vdwg.mxu0
      %v704 = vmax.f32 %v699, 0.0
      %v705 = vadd.f32 %v568, %v704
      %v706 = vpack.c.bf16 %v705, %v705
      %v707 = vld [vmem:[#allocation20] sm:$0xf]
      %v708 = vld [vmem:[#allocation20 + $0x4] sm:$0xf]
      %v709 = vld [vmem:[#allocation20 + $0x8] sm:$0xf]
      %v710 = vld [vmem:[#allocation20 + $0xc] sm:$0xf]
      %v711 = vld [vmem:[%s16] sm:$0x1]
      %v713 = vlaneseq
      %v714 = vshrl.u32 %v713, 7
      %v715 = vsub.s32 0, %v714
      %v716 = vrot.slane %v711, %v715
      %v722 = vunpack.c.l.b16 %v707
      %v723 = vunpack.c.l.b16 %v708
      %v724 = vunpack.c.l.b16 %v709
      %v725 = vunpack.c.l.b16 %v710
      %v726 = vpack.c.b16 %v723, %v722
      %v727 = vpack.c.b16 %v725, %v724
      %v731 = vsel %vm318, %v706, 0
      %733 = vmatprep.subr.bf16.mxu0 0
      %734 = vmatpush1.bf16.msra.mxu0 0
      %735 = vmatprep.subr.bf16.mxu0 0
      %736 = vmatpush1.bf16.msra.mxu0 0
      %737 = vmatprep.subr.bf16.mxu0 0
      %738 = vmatpush1.bf16.msra.mxu0 0
      %739 = vmatprep.subr.bf16.mxu0 0
      %740 = vmatpush1.bf16.msra.mxu0 0
      %741 = vmatprep.subr.bf16.mxu0 0
      %742 = vmatpush1.bf16.msra.mxu0 0
      %743 = vmatprep.subr.bf16.mxu0 0
      %744 = vmatpush1.bf16.msra.mxu0 0
      %745 = vmatprep.subr.bf16.mxu0 0
      %746 = vmatpush1.bf16.msra.mxu0 %v727
      %747 = vmatprep.subr.bf16.mxu0 0
      %748 = vmatpush1.bf16.msra.mxu0 %v726
      %749 = vmatprep.subr.bf16.mxu0 0
      %750 = vmatpush2.bf16.msra.mxu0 0
      %751 = vmatprep.subr.bf16.mxu0 0
      %752 = vmatpush2.bf16.msra.mxu0 0
      %753 = vmatprep.subr.bf16.mxu0 0
      %754 = vmatpush2.bf16.msra.mxu0 0
      %755 = vmatprep.subr.bf16.mxu0 0
      %756 = vmatpush2.bf16.msra.mxu0 0
      %757 = vmatprep.subr.bf16.mxu0 0
      %758 = vmatpush2.bf16.msra.mxu0 0
      %759 = vmatprep.subr.bf16.mxu0 0
      %760 = vmatpush2.bf16.msra.mxu0 0
      %761 = vmatprep.subr.bf16.mxu0 0
      %762 = vmatpush2.bf16.msra.mxu0 0
      %763 = vmatprep.subr.bf16.mxu0 0
      %764 = vmatpush2.bf16.msra.mxu0 0
      %765 = vmatprep.mubr.bf16.mxu0 0
      %766 = vmatmul.mubr.bf16.gmra.mxu0 %v731
      %v767 = vpop.f32.mrf.mxu0
      %v768 = vadd.f32 %v716, %v767
      %v769 = vpop.f32.mrf.mxu0
      %v770 = vpop.f32.mrf.mxu0
      %v771 = vpop.f32.mrf.mxu0
      %772 = vdwg.mxu0
      %v773 = vmax.f32 %v768, 0.0
      %v774 = vpack.c.bf16 %v773, %v773
      %v775 = vld [vmem:[#allocation21] sm:$0xf]
      %v776 = vld [vmem:[#allocation21 + $0x4] sm:$0xf]
      %v777 = vld [vmem:[#allocation21 + $0x8] sm:$0xf]
      %v778 = vld [vmem:[#allocation21 + $0xc] sm:$0xf]
      %v779 = vld [vmem:[%s18] sm:$0x1]
      %v781 = vlaneseq
      %v782 = vshrl.u32 %v781, 7
      %v783 = vsub.s32 0, %v782
      %v784 = vrot.slane %v779, %v783
      %v790 = vunpack.c.l.b16 %v775
      %v791 = vunpack.c.l.b16 %v776
      %v792 = vunpack.c.l.b16 %v777
      %v793 = vunpack.c.l.b16 %v778
      %v794 = vpack.c.b16 %v791, %v790
      %v795 = vpack.c.b16 %v793, %v792
      %v799 = vsel %vm318, %v774, 0
      %801 = vmatprep.subr.bf16.mxu0 0
      %802 = vmatpush1.bf16.msra.mxu0 0
      %803 = vmatprep.subr.bf16.mxu0 0
      %804 = vmatpush1.bf16.msra.mxu0 0
      %805 = vmatprep.subr.bf16.mxu0 0
      %806 = vmatpush1.bf16.msra.mxu0 0
      %807 = vmatprep.subr.bf16.mxu0 0
      %808 = vmatpush1.bf16.msra.mxu0 0
      %809 = vmatprep.subr.bf16.mxu0 0
      %810 = vmatpush1.bf16.msra.mxu0 0
      %811 = vmatprep.subr.bf16.mxu0 0
      %812 = vmatpush1.bf16.msra.mxu0 0
      %813 = vmatprep.subr.bf16.mxu0 0
      %814 = vmatpush1.bf16.msra.mxu0 %v795
      %815 = vmatprep.subr.bf16.mxu0 0
      %816 = vmatpush1.bf16.msra.mxu0 %v794
      %817 = vmatprep.subr.bf16.mxu0 0
      %818 = vmatpush2.bf16.msra.mxu0 0
      %819 = vmatprep.subr.bf16.mxu0 0
      %820 = vmatpush2.bf16.msra.mxu0 0
      %821 = vmatprep.subr.bf16.mxu0 0
      %822 = vmatpush2.bf16.msra.mxu0 0
      %823 = vmatprep.subr.bf16.mxu0 0
      %824 = vmatpush2.bf16.msra.mxu0 0
      %825 = vmatprep.subr.bf16.mxu0 0
      %826 = vmatpush2.bf16.msra.mxu0 0
      %827 = vmatprep.subr.bf16.mxu0 0
      %828 = vmatpush2.bf16.msra.mxu0 0
      %829 = vmatprep.subr.bf16.mxu0 0
      %830 = vmatpush2.bf16.msra.mxu0 0
      %831 = vmatprep.subr.bf16.mxu0 0
      %832 = vmatpush2.bf16.msra.mxu0 0
      %833 = vmatprep.mubr.bf16.mxu0 0
      %834 = vmatmul.mubr.bf16.gmra.mxu0 %v799
      %v835 = vpop.f32.mrf.mxu0
      %v836 = vadd.f32 %v784, %v835
      %v837 = vpop.f32.mrf.mxu0
      %v838 = vpop.f32.mrf.mxu0
      %v839 = vpop.f32.mrf.mxu0
      %840 = vdwg.mxu0
      %v841 = vmax.f32 %v836, 0.0
      %v842 = vadd.f32 %v705, %v841
      %843 = vst.msk [vmem:[#allocation2] sm:$0xff] %vm318, %v842
    $region137: #{tpu_custom_call.1} parent=1 // pred_fallthru
      _
    %v844 = vld [vmem:[#allocation2] sm:$0xff]
    %v845 = vpack.c.bf16 %v844, %v844
    %v846 = vld [vmem:[#allocation23] sm:$0xf]
    %v847 = vld [vmem:[#allocation23 + $0x4] sm:$0xf]
    %v848 = vld [vmem:[#allocation23 + $0x8] sm:$0xf]
    %v849 = vld [vmem:[#allocation23 + $0xc] sm:$0xf]
    %v854 = vunpack.c.l.b16 %v846
    %v855 = vunpack.c.l.b16 %v847
    %v856 = vunpack.c.l.b16 %v848
    %v857 = vunpack.c.l.b16 %v849
    %v858 = vpack.c.b16 %v855, %v854
    %v859 = vpack.c.b16 %v857, %v856
    %vm862 = vcmask 261120
    %v864 = vsel %vm862, %v845, 0
    %866 = vmatprep.subr.bf16.mxu0 0
    %867 = vmatpush1.bf16.msra.mxu0 0
    %868 = vmatprep.subr.bf16.mxu0 0
    %869 = vmatpush1.bf16.msra.mxu0 0
    %870 = vmatprep.subr.bf16.mxu0 0
    %871 = vmatpush1.bf16.msra.mxu0 0
    %872 = vmatprep.subr.bf16.mxu0 0
    %873 = vmatpush1.bf16.msra.mxu0 0
    %874 = vmatprep.subr.bf16.mxu0 0
    %875 = vmatpush1.bf16.msra.mxu0 0
    %876 = vmatprep.subr.bf16.mxu0 0
    %877 = vmatpush1.bf16.msra.mxu0 0
    %878 = vmatprep.subr.bf16.mxu0 0
    %879 = vmatpush1.bf16.msra.mxu0 %v859
    %880 = vmatprep.subr.bf16.mxu0 0
    %881 = vmatpush1.bf16.msra.mxu0 %v858
    %882 = vmatprep.subr.bf16.mxu0 0
    %883 = vmatpush2.bf16.msra.mxu0 0
    %884 = vmatprep.subr.bf16.mxu0 0
    %885 = vmatpush2.bf16.msra.mxu0 0
    %886 = vmatprep.subr.bf16.mxu0 0
    %887 = vmatpush2.bf16.msra.mxu0 0
    %888 = vmatprep.subr.bf16.mxu0 0
    %889 = vmatpush2.bf16.msra.mxu0 0
    %890 = vmatprep.subr.bf16.mxu0 0
    %891 = vmatpush2.bf16.msra.mxu0 0
    %892 = vmatprep.subr.bf16.mxu0 0
    %893 = vmatpush2.bf16.msra.mxu0 0
    %894 = vmatprep.subr.bf16.mxu0 0
    %895 = vmatpush2.bf16.msra.mxu0 0
    %896 = vmatprep.subr.bf16.mxu0 0
    %897 = vmatpush2.bf16.msra.mxu0 0
    %898 = vmatprep.mubr.bf16.mxu0 0
    %899 = vmatmul.mubr.bf16.gmra.mxu0 %v864
    %v900 = vpop.f32.mrf.mxu0
    %v901 = vadd.f32 0.0, %v900
    %v902 = vpop.f32.mrf.mxu0
    %v903 = vpop.f32.mrf.mxu0
    %v904 = vpop.f32.mrf.mxu0
    %905 = vdwg.mxu0
    %v906 = vsub.f32 0.0, %v901
    %v907 = vmul.f32 %v906, 1.442695
    %v908 = vpow.pop %v907
    %v909 = vadd.f32 %v908, 1.0
    %v910 = vrcp.pop %v909
    %911 = vst [vmem:[#allocation24] sm:$0xff] %v910
    // Predicated region
    $region138: #{tpu_custom_call.1} parent=1 // pred_check
      _
    $region139: #{tpu_custom_call.1} parent=1 // pred_check_branch
      %913 = sbr.rel (0) target = $region141
    $region140: #{tpu_custom_call.1} parent=1 // pred_region
      %s915 = ssub.s32 128, 128
      %916 = vsyncadd [#allocation5], %s915
      %s918 = sshll.u32 [#allocation24], 4
      %s919 = int_to_ptr.vmem [resolvable:$true] %s918
      %921 = dma.vmem_to_hbm [thread:$0]  %s919, 128, %s20, [#allocation5]
    $region141: #{tpu_custom_call.1} parent=1 // pred_fallthru
      _
    // Predicated region
    $region142: #{tpu_custom_call.1} parent=1 // pred_check
      _
    $region143: #{tpu_custom_call.1} parent=1 // pred_check_branch
      %923 = sbr.rel (0) target = $region145
    $region144: #{tpu_custom_call.1} parent=1 // pred_region
      %924 = dma.done [#allocation5], 128
    $region145: #{tpu_custom_call.1} parent=1 // pred_fallthru
      _
    %925 = vsyncpa [#allocation4], 1
    %926 = vsyncpa [#allocation7], 1
    %927 = vsyncpa [#allocation10], 1
    %928 = vsyncpa [#allocation13], 1
    %929 = vsyncpa [#allocation16], 1
    %930 = vsyncpa [#allocation19], 1
    %931 = vsyncpa [#allocation22], 1
    %932 = vsyncpa [#allocation5], 1

</llo_original>
